<compile_context>
chip_gen: v7x
topology: tpu7x:2x2x1
jax: 0.10.0
libtpu: 0.0.40
codegen_flags: <defaults>
</compile_context>

<pallas_src>
import functools

import jax
import jax.numpy as jnp
from jax.experimental import pallas as pl
from jax.experimental.pallas import tpu as pltpu


def _round_up(x, m):
    return (x + m - 1) // m * m


def _make_kernel(zp, test_mode):
    """Build the fused kernel. `zp` is the 128-aligned padded z width."""

    def kernel(*refs):
        if test_mode:
            x_ref, w1_ref, b1_ref, w23_ref, b23_ref, out_ref = refs
        else:
            x_ref, w1_ref, b1_ref, w23_ref, b23_ref, eps_ref, out_ref = refs

        # fc1 + ReLU (MXU matmul, f32 accumulation; bias add / relu in f32)
        h = jnp.dot(x_ref[...], w1_ref[...],
                    preferred_element_type=jnp.float32) + b1_ref[...]
        h = jnp.maximum(h, 0.0)

        # fused fc2|fc3 head: single matmul with 2*zp output columns
        head = jnp.dot(h.astype(w23_ref.dtype), w23_ref[...],
                       preferred_element_type=jnp.float32) + b23_ref[...]
        mu = head[:, :zp]
        log_var = jnp.clip(head[:, zp:], -20.0, 20.0)

        if test_mode:
            z = mu
        else:
            z = mu + jnp.exp(0.5 * log_var) * eps_ref[...]

        # lane-dense packed output slab: [ z | mu | log_var ], each zp wide,
        # written with 128-aligned full-lane stores.
        out_ref[:, 0 * zp:1 * zp] = z
        out_ref[:, 1 * zp:2 * zp] = mu
        out_ref[:, 2 * zp:3 * zp] = log_var

    return kernel


@functools.partial(jax.jit, static_argnames=("test_mode", "matmul_dtype"))
def vae_encoder_forward(x, params, eps=None, test_mode=False,
                        matmul_dtype=jnp.float32):
    """Fused VAE encoder.

    x:      (B, input_dim) float32
    params: dict with w1 (in,h), b1 (1,h), w2 (h,z), b2 (1,z), w3 (h,z), b3 (1,z)
            (weights transposed vs. torch.nn.Linear so the kernel does x @ W + b)
    eps:    (B, z_dim) standard-normal noise; unused / may be None if test_mode
    """
    B, in_dim = x.shape
    hidden = params["w1"].shape[1]
    z_dim = params["w2"].shape[1]

    # MXU / lane-aligned padded feature sizes (multiples of 128).
    in_p = _round_up(in_dim, 128)
    h_p = _round_up(hidden, 128)
    zp = _round_up(z_dim, 128)

    # Batch tiling: stream activation tiles, keep the weights resident.
    tile_b = 256 if B > 256 else _round_up(B, 16)
    b_p = _round_up(B, tile_b)
    nb = b_p // tile_b

    mm_dt = jnp.dtype(matmul_dtype)

    # Zero-padding is semantics-preserving: padded hidden/z columns stay
    # exactly zero through bias/ReLU and are sliced off at the end.
    x_p = jnp.pad(x, ((0, b_p - B), (0, in_p - in_dim))).astype(mm_dt)
    w1_p = jnp.pad(params["w1"],
                   ((0, in_p - in_dim), (0, h_p - hidden))).astype(mm_dt)
    b1_p = jnp.pad(params["b1"], ((0, 0), (0, h_p - hidden))).astype(jnp.float32)

    w2_p = jnp.pad(params["w2"], ((0, h_p - hidden), (0, zp - z_dim)))
    w3_p = jnp.pad(params["w3"], ((0, h_p - hidden), (0, zp - z_dim)))
    w23_p = jnp.concatenate([w2_p, w3_p], axis=1).astype(mm_dt)
    b2_p = jnp.pad(params["b2"], ((0, 0), (0, zp - z_dim)))
    b3_p = jnp.pad(params["b3"], ((0, 0), (0, zp - z_dim)))
    b23_p = jnp.concatenate([b2_p, b3_p], axis=1).astype(jnp.float32)

    inputs = [x_p, w1_p, b1_p, w23_p, b23_p]
    in_specs = [
        pl.BlockSpec((tile_b, in_p), lambda i: (i, 0)),   # x tile streams
        pl.BlockSpec((in_p, h_p), lambda i: (0, 0)),      # weights resident
        pl.BlockSpec((1, h_p), lambda i: (0, 0)),
        pl.BlockSpec((h_p, 2 * zp), lambda i: (0, 0)),
        pl.BlockSpec((1, 2 * zp), lambda i: (0, 0)),
    ]
    if not test_mode:
        if eps is None:
            raise ValueError("eps is required when test_mode=False")
        eps_p = jnp.pad(eps.astype(jnp.float32),
                        ((0, b_p - B), (0, zp - z_dim)))
        inputs.append(eps_p)
        in_specs.append(pl.BlockSpec((tile_b, zp), lambda i: (i, 0)))

    out_spec = pl.BlockSpec((tile_b, 3 * zp), lambda i: (i, 0))
    out_shape = jax.ShapeDtypeStruct((b_p, 3 * zp), jnp.float32)

    # VMEM budget: resident weights (x2 for safety) + double-buffered tiles,
    # plus headroom.  Fits well inside v7x's 64 MiB physical VMEM.
    mm_bytes = mm_dt.itemsize
    weight_bytes = (in_p * h_p + h_p * 2 * zp) * mm_bytes + (h_p + 2 * zp) * 4
    tile_bytes = tile_b * in_p * mm_bytes + tile_b * 3 * zp * 4
    if not test_mode:
        tile_bytes += tile_b * zp * 4
    vmem_limit = max(2 * weight_bytes + 2 * tile_bytes + (4 << 20), 16 << 20)

    flops = 2 * b_p * (in_p * h_p + h_p * 2 * zp)
    transcendentals = 0 if test_mode else b_p * zp
    bytes_accessed = (b_p * in_p * mm_bytes + weight_bytes
                      + b_p * 3 * zp * 4
                      + (0 if test_mode else b_p * zp * 4))

    out = pl.pallas_call(
        _make_kernel(zp, test_mode),
        out_shape=out_shape,
        grid=(nb,),
        in_specs=in_specs,
        out_specs=out_spec,
        compiler_params=pltpu.CompilerParams(
            dimension_semantics=("parallel",),
            vmem_limit_bytes=vmem_limit,
        ),
        cost_estimate=pl.CostEstimate(
            flops=flops,
            transcendentals=transcendentals,
            bytes_accessed=bytes_accessed,
        ),
    )(*inputs)

    z = out[:B, 0:z_dim]
    mu = out[:B, zp:zp + z_dim]
    log_var = out[:B, 2 * zp:2 * zp + z_dim]
    return z, mu, log_var


def init_params(key, input_dim, vae_hidden_dim, z_dim):
    """Deterministic init mimicking torch.nn.Linear defaults:
    U(-1/sqrt(fan_in), 1/sqrt(fan_in)) for both weight and bias."""
    ks = jax.random.split(key, 6)

    def lin(kw, kb, fan_in, fan_out):
        bound = 1.0 / jnp.sqrt(fan_in)
        w = jax.random.uniform(kw, (fan_in, fan_out), jnp.float32, -bound, bound)
        b = jax.random.uniform(kb, (1, fan_out), jnp.float32, -bound, bound)
        return w, b

    w1, b1 = lin(ks[0], ks[1], input_dim, vae_hidden_dim)
    w2, b2 = lin(ks[2], ks[3], vae_hidden_dim, z_dim)
    w3, b3 = lin(ks[4], ks[5], vae_hidden_dim, z_dim)
    return dict(w1=w1, b1=b1, w2=w2, b2=b2, w3=w3, b3=b3)


def reference_forward(x, params, eps, test_mode=False):
    """Pure-JAX reference for correctness checking."""
    h = jnp.maximum(x @ params["w1"] + params["b1"], 0.0)
    mu = h @ params["w2"] + params["b2"]
    log_var = jnp.clip(h @ params["w3"] + params["b3"], -20.0, 20.0)
    if test_mode:
        z = mu
    else:
        z = mu + jnp.exp(0.5 * log_var) * eps
    return z, mu, log_var


if __name__ == "__main__":
    key = jax.random.PRNGKey(0)
    k_params, k_x, k_eps = jax.random.split(key, 3)

    # Small shapes consistent with the module's forward (pure Linear on last dim).
    batch = 8
    input_dim = 32
    vae_hidden_dim = 64
    z_dim = 16

    params = init_params(k_params, input_dim, vae_hidden_dim, z_dim)
    x = jax.random.normal(k_x, (batch, input_dim), jnp.float32)
    eps = jax.random.normal(k_eps, (batch, z_dim), jnp.float32)

    # --- f32 matmul path: exact parity with the reference ---
    z, mu, log_var = vae_encoder_forward(x, params, eps, test_mode=False)
    jax.block_until_ready((z, mu, log_var))
    z_ref, mu_ref, lv_ref = reference_forward(x, params, eps, test_mode=False)
    assert jnp.allclose(z, z_ref, atol=1e-5, rtol=1e-5)
    assert jnp.allclose(mu, mu_ref, atol=1e-5, rtol=1e-5)
    assert jnp.allclose(log_var, lv_ref, atol=1e-5, rtol=1e-5)

    # --- test_mode: no eps input compiled in; sampled_z == mu exactly ---
    z_t, mu_t, lv_t = vae_encoder_forward(x, params, test_mode=True)
    jax.block_until_ready((z_t, mu_t, lv_t))
    assert jnp.array_equal(z_t, mu_t)
    assert jnp.allclose(mu_t, mu_ref, atol=1e-5, rtol=1e-5)

    # --- bf16 matmul-operand fast path (v6e/v7x MXU), f32 accumulation ---
    z_b, mu_b, lv_b = vae_encoder_forward(x, params, eps, test_mode=False,
                                          matmul_dtype=jnp.bfloat16)
    jax.block_until_ready((z_b, mu_b, lv_b))
    assert jnp.allclose(mu_b, mu_ref, atol=5e-2, rtol=5e-2)
    assert jnp.allclose(lv_b, lv_ref, atol=5e-2, rtol=5e-2)
    assert jnp.allclose(z_b, z_ref, atol=1e-1, rtol=5e-2)

    print("KERNEL_OK")
</pallas_src>

<mosaic_0001>
module attributes {stable_mosaic.version = 11 : i64} {
  func.func @kernel(%arg0: i32, %arg1: memref<16x128xf32, #tpu.memory_space<vmem>>, %arg2: memref<128x128xf32, #tpu.memory_space<vmem>>, %arg3: memref<1x128xf32, #tpu.memory_space<vmem>>, %arg4: memref<128x256xf32, #tpu.memory_space<vmem>>, %arg5: memref<1x256xf32, #tpu.memory_space<vmem>>, %arg6: memref<16x128xf32, #tpu.memory_space<vmem>>, %arg7: memref<16x384xf32, #tpu.memory_space<vmem>>) attributes {dimension_semantics = [#tpu.dimension_semantics<parallel>], iteration_bounds = array<i64: 1>, scalar_prefetch = 0 : i64, scratch_operands = 0 : i64, tpu.core_type = #tpu.core_type<tc>, window_params = [{transform_indices = @transform_0, window_bounds = array<i64: 16, 128>}, {pipeline_mode = #tpu.pipeline_mode<synchronous>, transform_indices = @transform_1, window_bounds = array<i64: 128, 128>}, {pipeline_mode = #tpu.pipeline_mode<synchronous>, transform_indices = @transform_2, window_bounds = array<i64: 1, 128>}, {pipeline_mode = #tpu.pipeline_mode<synchronous>, transform_indices = @transform_3, window_bounds = array<i64: 128, 256>}, {pipeline_mode = #tpu.pipeline_mode<synchronous>, transform_indices = @transform_4, window_bounds = array<i64: 1, 256>}, {transform_indices = @transform_5, window_bounds = array<i64: 16, 128>}, {transform_indices = @transform_6, window_bounds = array<i64: 16, 384>}]} {
    %c0 = arith.constant 0 : index
    %c0_0 = arith.constant 0 : index
    %0 = vector.load %arg1[%c0, %c0_0] : memref<16x128xf32, #tpu.memory_space<vmem>>, vector<16x128xf32>
    %c0_1 = arith.constant 0 : index
    %c0_2 = arith.constant 0 : index
    %1 = vector.load %arg2[%c0_1, %c0_2] : memref<128x128xf32, #tpu.memory_space<vmem>>, vector<128x128xf32>
    %cst = arith.constant dense<0.000000e+00> : vector<16x128xf32>
    %2 = tpu.matmul %0, %1, %cst {dimension_numbers = #tpu.dot_dimension_numbers<[1], [0], [0], [1], [0, 0, 1, 1], [], []>} : vector<16x128xf32>, vector<128x128xf32>, vector<16x128xf32> -> vector<16x128xf32>
    %c0_3 = arith.constant 0 : index
    %c0_4 = arith.constant 0 : index
    %3 = vector.load %arg3[%c0_3, %c0_4] : memref<1x128xf32, #tpu.memory_space<vmem>>, vector<1x128xf32>
    %4 = vector.broadcast %3 : vector<1x128xf32> to vector<16x128xf32>
    %5 = arith.addf %2, %4 : vector<16x128xf32>
    %cst_5 = arith.constant 0.000000e+00 : f32
    %6 = vector.broadcast %cst_5 : f32 to vector<16x128xf32>
    %7 = arith.maximumf %5, %6 : vector<16x128xf32>
    %c0_6 = arith.constant 0 : index
    %c0_7 = arith.constant 0 : index
    %8 = vector.load %arg4[%c0_6, %c0_7] : memref<128x256xf32, #tpu.memory_space<vmem>>, vector<128x256xf32>
    %cst_8 = arith.constant dense<0.000000e+00> : vector<16x256xf32>
    %9 = tpu.matmul %7, %8, %cst_8 {dimension_numbers = #tpu.dot_dimension_numbers<[1], [0], [0], [1], [0, 0, 1, 1], [], []>} : vector<16x128xf32>, vector<128x256xf32>, vector<16x256xf32> -> vector<16x256xf32>
    %c0_9 = arith.constant 0 : index
    %c0_10 = arith.constant 0 : index
    %10 = vector.load %arg5[%c0_9, %c0_10] : memref<1x256xf32, #tpu.memory_space<vmem>>, vector<1x256xf32>
    %11 = vector.broadcast %10 : vector<1x256xf32> to vector<16x256xf32>
    %12 = arith.addf %9, %11 : vector<16x256xf32>
    %13 = vector.extract_strided_slice %12 {offsets = [0, 0], sizes = [16, 128], strides = [1, 1]} : vector<16x256xf32> to vector<16x128xf32>
    %14 = vector.extract_strided_slice %12 {offsets = [0, 128], sizes = [16, 128], strides = [1, 1]} : vector<16x256xf32> to vector<16x128xf32>
    %cst_11 = arith.constant -2.000000e+01 : f32
    %cst_12 = arith.constant 2.000000e+01 : f32
    %15 = vector.broadcast %cst_11 : f32 to vector<16x128xf32>
    %16 = arith.maximumf %15, %14 : vector<16x128xf32>
    %17 = vector.broadcast %cst_12 : f32 to vector<16x128xf32>
    %18 = arith.minimumf %17, %16 : vector<16x128xf32>
    %cst_13 = arith.constant 5.000000e-01 : f32
    %19 = vector.broadcast %cst_13 : f32 to vector<16x128xf32>
    %20 = arith.mulf %19, %18 : vector<16x128xf32>
    %21 = math.exp %20 : vector<16x128xf32>
    %c0_14 = arith.constant 0 : index
    %c0_15 = arith.constant 0 : index
    %22 = vector.load %arg6[%c0_14, %c0_15] : memref<16x128xf32, #tpu.memory_space<vmem>>, vector<16x128xf32>
    %23 = arith.mulf %21, %22 : vector<16x128xf32>
    %24 = arith.addf %13, %23 : vector<16x128xf32>
    %c0_16 = arith.constant 0 : index
    %c0_17 = arith.constant 0 : index
    %25 = vector.load %arg7[%c0_16, %c0_17] : memref<16x384xf32, #tpu.memory_space<vmem>>, vector<16x128xf32>
    tpu.vector_store %arg7[%c0_16, %c0_17], %24 {strides = array<i32>} : memref<16x384xf32, #tpu.memory_space<vmem>>, vector<16x128xf32>,
    %c0_18 = arith.constant 0 : index
    %c128 = arith.constant 128 : index
    %26 = vector.load %arg7[%c0_18, %c128] : memref<16x384xf32, #tpu.memory_space<vmem>>, vector<16x128xf32>
    tpu.vector_store %arg7[%c0_18, %c128], %13 {strides = array<i32>} : memref<16x384xf32, #tpu.memory_space<vmem>>, vector<16x128xf32>,
    %c0_19 = arith.constant 0 : index
    %c256 = arith.constant 256 : index
    %27 = vector.load %arg7[%c0_19, %c256] : memref<16x384xf32, #tpu.memory_space<vmem>>, vector<16x128xf32>
    tpu.vector_store %arg7[%c0_19, %c256], %18 {strides = array<i32>} : memref<16x384xf32, #tpu.memory_space<vmem>>, vector<16x128xf32>,
    return
  }
  func.func @transform_0(%arg0: i32) -> (i32, i32) {
    %c0_i32 = arith.constant 0 : i32
    %c0_i32_0 = arith.constant 0 : i32
    return %arg0, %c0_i32 : i32, i32
  }
  func.func @transform_1(%arg0: i32) -> (i32, i32) {
    %c0_i32 = arith.constant 0 : i32
    %c0_i32_0 = arith.constant 0 : i32
    %c0_i32_1 = arith.constant 0 : i32
    return %c0_i32, %c0_i32_0 : i32, i32
  }
  func.func @transform_2(%arg0: i32) -> (i32, i32) {
    %c0_i32 = arith.constant 0 : i32
    %c0_i32_0 = arith.constant 0 : i32
    %c0_i32_1 = arith.constant 0 : i32
    return %c0_i32, %c0_i32_0 : i32, i32
  }
  func.func @transform_3(%arg0: i32) -> (i32, i32) {
    %c0_i32 = arith.constant 0 : i32
    %c0_i32_0 = arith.constant 0 : i32
    %c0_i32_1 = arith.constant 0 : i32
    return %c0_i32, %c0_i32_0 : i32, i32
  }
  func.func @transform_4(%arg0: i32) -> (i32, i32) {
    %c0_i32 = arith.constant 0 : i32
    %c0_i32_0 = arith.constant 0 : i32
    %c0_i32_1 = arith.constant 0 : i32
    return %c0_i32, %c0_i32_0 : i32, i32
  }
  func.func @transform_5(%arg0: i32) -> (i32, i32) {
    %c0_i32 = arith.constant 0 : i32
    %c0_i32_0 = arith.constant 0 : i32
    return %arg0, %c0_i32 : i32, i32
  }
  func.func @transform_6(%arg0: i32) -> (i32, i32) {
    %c0_i32 = arith.constant 0 : i32
    %c0_i32_0 = arith.constant 0 : i32
    return %arg0, %c0_i32 : i32, i32
  }
}

</mosaic_0001>

<llo_original>
// kernel: vae_encoder_forward.1
$region0: #{vae_encoder_forward.1}
  #allocation0 [shape = 'u32[]', space=smem, size = 0x4, offset = 0x4, fixed_abs, tag = 'smem constant byte address 0x4 - core index']
  #allocation1 [shape = 'u32[144,128]{1,0:T(1,128)}', space=vmem, size = 0x12000, scoped, tag = 'internal scratch']
  %s0 = inlined_call_operand.vmem [shape: f32[16,128], index: 0, kind: input, shape index: {}]
  %s1 = inlined_call_operand.vmem [shape: f32[128,128], index: 1, kind: input, shape index: {}]
  %s2 = inlined_call_operand.vmem [shape: f32[1,128], index: 2, kind: input, shape index: {}]
  %s3 = inlined_call_operand.vmem [shape: f32[128,256], index: 3, kind: input, shape index: {}]
  %s4 = inlined_call_operand.vmem [shape: f32[1,256], index: 4, kind: input, shape index: {}]
  %s5 = inlined_call_operand.vmem [shape: f32[16,128], index: 5, kind: input, shape index: {}]
  %s6 = inlined_call_operand.vmem [shape: f32[16,384], index: 6, kind: output, shape index: {}]
  %s7 = sld [smem:[#allocation0]]
  $region34: #{vae_encoder_forward.1} parent=0
    _
  %s9 = ssub.s32 1, %s7
  %s10 = scalar_select 0, %s9, %s7
  // Predicated region
  $region2: #{vae_encoder_forward.1} parent=0 // pred_check
    _
  $region3: #{vae_encoder_forward.1} parent=0 // pred_check_branch
    %12 = sbr.rel (0) target = $region5
  $region4: #{vae_encoder_forward.1} parent=0 // pred_region
    _
  $region5: #{vae_encoder_forward.1} parent=0 // pred_fallthru
    _
  // Predicated region
  $region6: #{vae_encoder_forward.1} parent=0 // pred_check
    _
  $region7: #{vae_encoder_forward.1} parent=0 // pred_check_branch
    %14 = sbr.rel (0) target = $region9
  $region8: #{vae_encoder_forward.1} parent=0 // pred_region
    _
  $region9: #{vae_encoder_forward.1} parent=0 // pred_fallthru
    _
  // Predicated region
  $region10: #{vae_encoder_forward.1} parent=0 // pred_check
    _
  $region11: #{vae_encoder_forward.1} parent=0 // pred_check_branch
    %16 = sbr.rel (0) target = $region13
  $region12: #{vae_encoder_forward.1} parent=0 // pred_region
    _
  $region13: #{vae_encoder_forward.1} parent=0 // pred_fallthru
    _
  // Predicated region
  $region14: #{vae_encoder_forward.1} parent=0 // pred_check
    _
  $region15: #{vae_encoder_forward.1} parent=0 // pred_check_branch
    %18 = sbr.rel (0) target = $region17
  $region16: #{vae_encoder_forward.1} parent=0 // pred_region
    _
  $region17: #{vae_encoder_forward.1} parent=0 // pred_fallthru
    _
  // Predicated region
  $region18: #{vae_encoder_forward.1} parent=0 // pred_check
    _
  $region19: #{vae_encoder_forward.1} parent=0 // pred_check_branch
    %20 = sbr.rel (0) target = $region21
  $region20: #{vae_encoder_forward.1} parent=0 // pred_region
    _
  $region21: #{vae_encoder_forward.1} parent=0 // pred_fallthru
    _
  // Predicated region
  $region22: #{vae_encoder_forward.1} parent=0 // pred_check
    _
  $region23: #{vae_encoder_forward.1} parent=0 // pred_check_branch
    %22 = sbr.rel (0) target = $region25
  $region24: #{vae_encoder_forward.1} parent=0 // pred_region
    _
  $region25: #{vae_encoder_forward.1} parent=0 // pred_fallthru
    _
  %v23 = vld [vmem:[%s0] sm:$0xff]
  %v24 = vld [vmem:[%s0 + $0x8] sm:$0xff]
  %v25 = vld [vmem:[%s1] sm:$0xff]
  %v26 = vld [vmem:[%s1 + $0x8] sm:$0xff]
  %v27 = vld [vmem:[%s1 + $0x10] sm:$0xff]
  %v28 = vld [vmem:[%s1 + $0x18] sm:$0xff]
  %v29 = vld [vmem:[%s1 + $0x20] sm:$0xff]
  %v30 = vld [vmem:[%s1 + $0x28] sm:$0xff]
  %v31 = vld [vmem:[%s1 + $0x30] sm:$0xff]
  %v32 = vld [vmem:[%s1 + $0x38] sm:$0xff]
  %v33 = vld [vmem:[%s1 + $0x40] sm:$0xff]
  %v34 = vld [vmem:[%s1 + $0x48] sm:$0xff]
  %v35 = vld [vmem:[%s1 + $0x50] sm:$0xff]
  %v36 = vld [vmem:[%s1 + $0x58] sm:$0xff]
  %v37 = vld [vmem:[%s1 + $0x60] sm:$0xff]
  %v38 = vld [vmem:[%s1 + $0x68] sm:$0xff]
  %v39 = vld [vmem:[%s1 + $0x70] sm:$0xff]
  %v40 = vld [vmem:[%s1 + $0x78] sm:$0xff]
  %v41 = vld [vmem:[%s2] sm:$0x1]
  %v43 = vlaneseq
  %v44 = vshrl.u32 %v43, 7
  %v45 = vsub.s32 0, %v44
  %v46 = vrot.slane %v41, %v45
  %48 = vmatprep.subr.mxu0 0.0
  %49 = vmatpush1.msra.mxu0 %v25
  %50 = vmatprep.subr.mxu0 0.0
  %51 = vmatpush1.msra.mxu0 %v26
  %52 = vmatprep.subr.mxu0 0.0
  %53 = vmatpush1.msra.mxu0 %v27
  %54 = vmatprep.subr.mxu0 0.0
  %55 = vmatpush1.msra.mxu0 %v28
  %56 = vmatprep.subr.mxu0 0.0
  %57 = vmatpush1.msra.mxu0 %v29
  %58 = vmatprep.subr.mxu0 0.0
  %59 = vmatpush1.msra.mxu0 %v30
  %60 = vmatprep.subr.mxu0 0.0
  %61 = vmatpush1.msra.mxu0 %v31
  %62 = vmatprep.subr.mxu0 0.0
  %63 = vmatpush1.msra.mxu0 %v32
  %64 = vmatprep.subr.mxu0 0.0
  %65 = vmatpush1.msra.mxu0 %v33
  %66 = vmatprep.subr.mxu0 0.0
  %67 = vmatpush1.msra.mxu0 %v34
  %68 = vmatprep.subr.mxu0 0.0
  %69 = vmatpush1.msra.mxu0 %v35
  %70 = vmatprep.subr.mxu0 0.0
  %71 = vmatpush1.msra.mxu0 %v36
  %72 = vmatprep.subr.mxu0 0.0
  %73 = vmatpush1.msra.mxu0 %v37
  %74 = vmatprep.subr.mxu0 0.0
  %75 = vmatpush1.msra.mxu0 %v38
  %76 = vmatprep.subr.mxu0 0.0
  %77 = vmatpush1.msra.mxu0 %v39
  %78 = vmatprep.subr.mxu0 0.0
  %79 = vmatpush1.msra.mxu0 %v40
  %80 = vmatprep.subr.mxu0 0.0
  %81 = vmatpush1.msra.mxu0 0.0
  %82 = vmatprep.subr.mxu0 0.0
  %83 = vmatpush1.msra.mxu0 0.0
  %84 = vmatprep.subr.mxu0 0.0
  %85 = vmatpush1.msra.mxu0 0.0
  %86 = vmatprep.subr.mxu0 0.0
  %87 = vmatpush1.msra.mxu0 0.0
  %88 = vmatprep.subr.mxu0 0.0
  %89 = vmatpush1.msra.mxu0 0.0
  %90 = vmatprep.subr.mxu0 0.0
  %91 = vmatpush1.msra.mxu0 0.0
  %92 = vmatprep.subr.mxu0 0.0
  %93 = vmatpush1.msra.mxu0 0.0
  %94 = vmatprep.subr.mxu0 0.0
  %95 = vmatpush1.msra.mxu0 0.0
  %96 = vmatprep.subr.mxu0 0.0
  %97 = vmatpush1.msra.mxu0 0.0
  %98 = vmatprep.subr.mxu0 0.0
  %99 = vmatpush1.msra.mxu0 0.0
  %100 = vmatprep.subr.mxu0 0.0
  %101 = vmatpush1.msra.mxu0 0.0
  %102 = vmatprep.subr.mxu0 0.0
  %103 = vmatpush1.msra.mxu0 0.0
  %104 = vmatprep.subr.mxu0 0.0
  %105 = vmatpush1.msra.mxu0 0.0
  %106 = vmatprep.subr.mxu0 0.0
  %107 = vmatpush1.msra.mxu0 0.0
  %108 = vmatprep.subr.mxu0 0.0
  %109 = vmatpush1.msra.mxu0 0.0
  %110 = vmatprep.subr.mxu0 0.0
  %111 = vmatpush1.msra.mxu0 0.0
  %112 = vmatprep.mubr.f32.mxu0 0.0
  %113 = vmatmul.mubr.f32.gmra.mrb[0].mxu0 %v23
  %v114 = vpop.f32.mrb[0].mxu0
  %v115 = vadd.f32 %v46, %v114
  %v116 = vpop.f32.mrb[0].mxu0
  %117 = vmatprep.mubr.f32.mxu0 0.0
  %118 = vmatmul.mubr.f32.gmra.mrb[0].mxu0 %v24
  %v119 = vpop.f32.mrb[0].mxu0
  %v120 = vadd.f32 %v46, %v119
  %v121 = vpop.f32.mrb[0].mxu0
  %122 = vdwg.mxu0
  %v123 = vmax.f32 %v115, 0.0
  %v124 = vmax.f32 %v120, 0.0
  %v125 = vld [vmem:[%s3] sm:$0xff]
  %v126 = vld [vmem:[%s3 + $0x8] sm:$0xff]
  %v127 = vld [vmem:[%s3 + $0x10] sm:$0xff]
  %v128 = vld [vmem:[%s3 + $0x18] sm:$0xff]
  %v129 = vld [vmem:[%s3 + $0x20] sm:$0xff]
  %v130 = vld [vmem:[%s3 + $0x28] sm:$0xff]
  %v131 = vld [vmem:[%s3 + $0x30] sm:$0xff]
  %v132 = vld [vmem:[%s3 + $0x38] sm:$0xff]
  %v133 = vld [vmem:[%s3 + $0x40] sm:$0xff]
  %v134 = vld [vmem:[%s3 + $0x48] sm:$0xff]
  %v135 = vld [vmem:[%s3 + $0x50] sm:$0xff]
  %v136 = vld [vmem:[%s3 + $0x58] sm:$0xff]
  %v137 = vld [vmem:[%s3 + $0x60] sm:$0xff]
  %v138 = vld [vmem:[%s3 + $0x68] sm:$0xff]
  %v139 = vld [vmem:[%s3 + $0x70] sm:$0xff]
  %v140 = vld [vmem:[%s3 + $0x78] sm:$0xff]
  %v141 = vld [vmem:[%s3 + $0x80] sm:$0xff]
  %v142 = vld [vmem:[%s3 + $0x88] sm:$0xff]
  %v143 = vld [vmem:[%s3 + $0x90] sm:$0xff]
  %v144 = vld [vmem:[%s3 + $0x98] sm:$0xff]
  %v145 = vld [vmem:[%s3 + $0xa0] sm:$0xff]
  %v146 = vld [vmem:[%s3 + $0xa8] sm:$0xff]
  %v147 = vld [vmem:[%s3 + $0xb0] sm:$0xff]
  %v148 = vld [vmem:[%s3 + $0xb8] sm:$0xff]
  %v149 = vld [vmem:[%s3 + $0xc0] sm:$0xff]
  %v150 = vld [vmem:[%s3 + $0xc8] sm:$0xff]
  %v151 = vld [vmem:[%s3 + $0xd0] sm:$0xff]
  %v152 = vld [vmem:[%s3 + $0xd8] sm:$0xff]
  %v153 = vld [vmem:[%s3 + $0xe0] sm:$0xff]
  %v154 = vld [vmem:[%s3 + $0xe8] sm:$0xff]
  %v155 = vld [vmem:[%s3 + $0xf0] sm:$0xff]
  %v156 = vld [vmem:[%s3 + $0xf8] sm:$0xff]
  %v157 = vld [vmem:[%s4] sm:$0x3]
  %v159 = vlaneseq
  %v160 = vshrl.u32 %v159, 7
  %v161 = vsub.s32 0, %v160
  %v162 = vrot.slane %v157, %v161
  %v163 = vlaneseq
  %v164 = vshrl.u32 %v163, 7
  %v165 = vsub.s32 1, %v164
  %v166 = vrot.slane %v157, %v165
  %169 = vmatprep.subr.mxu0 %v126
  %170 = vmatpush1.msra.mxu0 %v125
  %171 = vmatprep.subr.mxu0 %v128
  %172 = vmatpush1.msra.mxu0 %v127
  %173 = vmatprep.subr.mxu0 %v130
  %174 = vmatpush1.msra.mxu0 %v129
  %175 = vmatprep.subr.mxu0 %v132
  %176 = vmatpush1.msra.mxu0 %v131
  %177 = vmatprep.subr.mxu0 %v134
  %178 = vmatpush1.msra.mxu0 %v133
  %179 = vmatprep.subr.mxu0 %v136
  %180 = vmatpush1.msra.mxu0 %v135
  %181 = vmatprep.subr.mxu0 %v138
  %182 = vmatpush1.msra.mxu0 %v137
  %183 = vmatprep.subr.mxu0 %v140
  %184 = vmatpush1.msra.mxu0 %v139
  %185 = vmatprep.subr.mxu0 %v142
  %186 = vmatpush1.msra.mxu0 %v141
  %187 = vmatprep.subr.mxu0 %v144
  %188 = vmatpush1.msra.mxu0 %v143
  %189 = vmatprep.subr.mxu0 %v146
  %190 = vmatpush1.msra.mxu0 %v145
  %191 = vmatprep.subr.mxu0 %v148
  %192 = vmatpush1.msra.mxu0 %v147
  %193 = vmatprep.subr.mxu0 %v150
  %194 = vmatpush1.msra.mxu0 %v149
  %195 = vmatprep.subr.mxu0 %v152
  %196 = vmatpush1.msra.mxu0 %v151
  %197 = vmatprep.subr.mxu0 %v154
  %198 = vmatpush1.msra.mxu0 %v153
  %199 = vmatprep.subr.mxu0 %v156
  %200 = vmatpush1.msra.mxu0 %v155
  %201 = vmatprep.subr.mxu0 0.0
  %202 = vmatpush1.msra.mxu0 0.0
  %203 = vmatprep.subr.mxu0 0.0
  %204 = vmatpush1.msra.mxu0 0.0
  %205 = vmatprep.subr.mxu0 0.0
  %206 = vmatpush1.msra.mxu0 0.0
  %207 = vmatprep.subr.mxu0 0.0
  %208 = vmatpush1.msra.mxu0 0.0
  %209 = vmatprep.subr.mxu0 0.0
  %210 = vmatpush1.msra.mxu0 0.0
  %211 = vmatprep.subr.mxu0 0.0
  %212 = vmatpush1.msra.mxu0 0.0
  %213 = vmatprep.subr.mxu0 0.0
  %214 = vmatpush1.msra.mxu0 0.0
  %215 = vmatprep.subr.mxu0 0.0
  %216 = vmatpush1.msra.mxu0 0.0
  %217 = vmatprep.subr.mxu0 0.0
  %218 = vmatpush1.msra.mxu0 0.0
  %219 = vmatprep.subr.mxu0 0.0
  %220 = vmatpush1.msra.mxu0 0.0
  %221 = vmatprep.subr.mxu0 0.0
  %222 = vmatpush1.msra.mxu0 0.0
  %223 = vmatprep.subr.mxu0 0.0
  %224 = vmatpush1.msra.mxu0 0.0
  %225 = vmatprep.subr.mxu0 0.0
  %226 = vmatpush1.msra.mxu0 0.0
  %227 = vmatprep.subr.mxu0 0.0
  %228 = vmatpush1.msra.mxu0 0.0
  %229 = vmatprep.subr.mxu0 0.0
  %230 = vmatpush1.msra.mxu0 0.0
  %231 = vmatprep.subr.mxu0 0.0
  %232 = vmatpush1.msra.mxu0 0.0
  %233 = vmatprep.mubr.f32.mxu0 0.0
  %234 = vmatmul.mubr.f32.gmra.mrb[0].mxu0 %v123
  %v235 = vpop.f32.mrb[0].mxu0
  %v236 = vadd.f32 %v162, %v235
  %v237 = vpop.f32.mrb[0].mxu0
  %v238 = vadd.f32 %v166, %v237
  %239 = vmatprep.mubr.f32.mxu0 0.0
  %240 = vmatmul.mubr.f32.gmra.mrb[0].mxu0 %v124
  %v241 = vpop.f32.mrb[0].mxu0
  %v242 = vadd.f32 %v162, %v241
  %v243 = vpop.f32.mrb[0].mxu0
  %v244 = vadd.f32 %v166, %v243
  %245 = vdwg.mxu0
  %v246 = vmax.f32 %v238, -20.0
  %v247 = vmax.f32 %v244, -20.0
  %v248 = vmin.f32 %v246, 20.0
  %v249 = vmin.f32 %v247, 20.0
  %v250 = vmul.f32 %v248, 0.5
  %v251 = vmul.f32 %v249, 0.5
  %v252 = vmul.f32 %v250, 1.442695
  %v253 = vpow.pop %v252
  %v254 = vmul.f32 %v251, 1.442695
  %v255 = vpow.pop %v254
  %v256 = vld [vmem:[%s5] sm:$0xff]
  %v257 = vld [vmem:[%s5 + $0x8] sm:$0xff]
  %v258 = vmul.f32 %v253, %v256
  %v259 = vmul.f32 %v255, %v257
  %v260 = vadd.f32 %v236, %v258
  %v261 = vadd.f32 %v242, %v259
  %262 = vst [vmem:[%s6] sm:$0xff] %v260
  %263 = vst [vmem:[%s6 + $0x18] sm:$0xff] %v261
  %264 = vst [vmem:[%s6 + $0x8] sm:$0xff] %v236
  %265 = vst [vmem:[%s6 + $0x20] sm:$0xff] %v242
  %266 = vst [vmem:[%s6 + $0x10] sm:$0xff] %v248
  %267 = vst [vmem:[%s6 + $0x28] sm:$0xff] %v249
  // Predicated region
  $region26: #{vae_encoder_forward.1} parent=0 // pred_check
    _
  $region27: #{vae_encoder_forward.1} parent=0 // pred_check_branch
    %269 = sbr.rel (0) target = $region29
  $region28: #{vae_encoder_forward.1} parent=0 // pred_region
    _
  $region29: #{vae_encoder_forward.1} parent=0 // pred_fallthru
    _
  // Predicated region
  $region30: #{vae_encoder_forward.1} parent=0 // pred_check
    _
  $region31: #{vae_encoder_forward.1} parent=0 // pred_check_branch
    %271 = sbr.rel (0) target = $region33
  $region32: #{vae_encoder_forward.1} parent=0 // pred_region
    _
  $region33: #{vae_encoder_forward.1} parent=0 // pred_fallthru
    _

</llo_original>
